<compile_context>
chip_gen: v6e
topology: v6e:2x2x1
jax: 0.10.0
libtpu: 0.0.40
codegen_flags: <defaults>
</compile_context>

<pallas_src>
import jax
import jax.numpy as jnp
from jax import lax
from jax.experimental import pallas as pl
from jax.experimental.pallas import tpu as pltpu


def _round_up(x, m):
    return (x + m - 1) // m * m


# ----------------------------------------------------------------------------
# Kernel 1: key_comp 3x3 conv (padding=1) as a single fused-im2col GEMM.
#
# Grid = (B, Cin-chunks).  Per step: stage the 9 statically-shifted (Ck, Pt) slabs
# into a (9*Ck, Pt) bf16 im2col scratch, then one (Cout, 9*Ck) x (9*Ck, Pt) MXU push
# with f32 accumulation in VMEM across the Cin-chunk (reduction) axis.
# Output is channel-major (NCHW), lane axis = flattened spatial padded to x128.
# ----------------------------------------------------------------------------
def key_comp(x_nchw, w_oihw, bias):
    """3x3 conv, padding=1, stride=1.  x_nchw: (B, Cin, H, W); w: (Cout, Cin, 3, 3)."""
    B, Cin, H, W = x_nchw.shape
    Cout = w_oihw.shape[0]
    Hp, Wp = H + 2, W + 2
    P = Hp * Wp                       # flattened, spatially-padded output domain
    Pt = _round_up(P, 128)            # lane-padded output extent -> lane-dense stores
    M = Wp + 1                        # max |tap shift| in flattened coords
    Ppad = Pt + 2 * M                 # input extent incl. halo on both sides

    # Cin reduction chunking: gives the pipeliner more than B steps and bounds the
    # per-step VMEM footprint (matters on v7x's 64 MiB VMEM at realistic Cin ~512-1024).
    Ck = 128 if Cin % 128 == 0 else Cin
    n_k = Cin // Ck
    K = 9 * Ck
    # TODO(synk): for very large feature maps a spatial tile axis (halo via manual DMA)
    #             would be the next step; at small Cout the conv is DMA/store-bound.

    # --- wrapper glue (cheap; no 9x im2col blow-up in HBM) ---
    # zero-pad spatially (conv padding=1), flatten spatial, add a flat halo of M zeros
    # on the left and (Pt - P) + M on the right so every tap window is a static,
    # in-range lane slice of size Pt.
    x_pad = jnp.pad(x_nchw, ((0, 0), (0, 0), (1, 1), (1, 1)))
    x_flat = x_pad.reshape(B, Cin, P)
    x_flat = jnp.pad(x_flat, ((0, 0), (0, 0), (M, M + Pt - P))).astype(jnp.bfloat16)

    # weights -> (n_k, Cout, 9*Ck); K ordered (tap, channel-within-chunk)
    w_t = jnp.transpose(w_oihw, (0, 2, 3, 1))                    # (Cout, 3, 3, Cin)
    w_r = w_t.reshape(Cout, 9, n_k, Ck)
    w_r = jnp.transpose(w_r, (2, 0, 1, 3)).reshape(n_k, Cout, K).astype(jnp.bfloat16)
    b2d = bias.reshape(Cout, 1).astype(jnp.float32)

    # flattened tap shifts, tap order t = dy*3 + dx (matches w_r's K ordering)
    shifts = tuple((dy - 1) * Wp + (dx - 1) for dy in range(3) for dx in range(3))

    def kernel(x_ref, w_ref, b_ref, o_ref, col_ref, acc_ref):
        # x_ref: (1, Ck, Ppad) bf16   w_ref: (1, Cout, 9*Ck) bf16   b_ref: (Cout, 1) f32
        # o_ref: (1, Cout, Pt) f32    col_ref: (9*Ck, Pt) bf16      acc_ref: (Cout, Pt) f32
        kc = pl.program_id(1)

        @pl.when(kc == 0)
        def _():
            acc_ref[...] = jnp.zeros_like(acc_ref)

        # Stage the 9 shifted slabs (static lane offsets) into the im2col scratch.
        for t, s in enumerate(shifts):
            col_ref[t * Ck:(t + 1) * Ck, :] = x_ref[0, :, pl.ds(M + s, Pt)]

        # One K = 9*Ck MXU push (instead of 9 tiny K = Cin dots); f32 VMEM accumulator
        # so consecutive dots accumulate in place across the Cin-chunk grid axis.
        acc_ref[...] += jnp.dot(w_ref[0], col_ref[...],
                                preferred_element_type=jnp.float32)

        @pl.when(kc == pl.num_programs(1) - 1)
        def _():
            o_ref[0] = (acc_ref[...] + b_ref[...]).astype(o_ref.dtype)

    out_flat = pl.pallas_call(
        kernel,
        out_shape=jax.ShapeDtypeStruct((B, Cout, Pt), jnp.float32),
        grid_spec=pltpu.PrefetchScalarGridSpec(
            num_scalar_prefetch=0,
            grid=(B, n_k),                                   # reduction axis last
            in_specs=[
                pl.BlockSpec((1, Ck, Ppad), lambda b, kc: (b, kc, 0)),
                pl.BlockSpec((1, Cout, K), lambda b, kc: (kc, 0, 0)),
                pl.BlockSpec((Cout, 1), lambda b, kc: (0, 0)),
            ],
            out_specs=pl.BlockSpec((1, Cout, Pt), lambda b, kc: (b, 0, 0)),
            scratch_shapes=[
                pltpu.VMEM((K, Pt), jnp.bfloat16),           # im2col scratch
                pltpu.VMEM((Cout, Pt), jnp.float32),         # f32 accumulator
            ],
        ),
        compiler_params=pltpu.CompilerParams(
            dimension_semantics=("parallel", "arbitrary"),
            vmem_limit_bytes=32 * 1024 * 1024,
        ),
    )(x_flat, w_r, b2d)

    # already channel-major; drop the lane padding and the padded spatial border
    return out_flat[:, :, :P].reshape(B, Cout, Hp, Wp)[:, :, 1:H + 1, 1:W + 1]


# ----------------------------------------------------------------------------
# Kernel 2: decode post-path: sigmoid -> valid_obj mask -> aggregate -> softmax.
# HW is always padded + tiled in 128-multiples; valid_obj is a (1, N, 1) VMEM block
# applied with one broadcast multiply; softmax is computed from odds (no exp/max),
# with the final divide on the EUP via pl.reciprocal(approx=True).
# ----------------------------------------------------------------------------
def decode_post(decoder_logits, valid_obj, max_tile=8192):
    """decoder_logits: (B, N, H, W); valid_obj: (B, N+1).  Returns (logits, pred_mask),
    each (B, N+1, H, W) — matches SWEM.decode()'s post-decoder math."""
    B, N, H, W = decoder_logits.shape
    HW = H * W
    # Always tile: pad HW up to a 128-multiple tile instead of falling back to T = HW
    # (which can blow past scoped VMEM at full-resolution masks).
    T = min(max_tile, _round_up(HW, 128))
    HWp = _round_up(HW, T)
    nt = HWp // T

    dl = decoder_logits.reshape(B, N, HW).astype(jnp.float32)
    if HWp != HW:
        dl = jnp.pad(dl, ((0, 0), (0, 0), (0, HWp - HW)))
    vo = valid_obj[:, 1:].astype(jnp.float32).reshape(B, N, 1)

    def kernel(vo_ref, dl_ref, logits_ref, mask_ref):
        # vo_ref: (1, N, 1) f32; dl_ref: (1, N, T) f32; outputs: (1, N+1, T) f32
        p = jax.nn.sigmoid(dl_ref[...]) * vo_ref[...]            # one broadcast multiply
        q = 1.0 - p
        # background prob = prod_i(1 - p_i); N (object count) is small, so a short
        # unrolled chain of full-width VPU multiplies is cheap and avoids depending on
        # a multiplicative sublane-reduction lowering.
        bg = q[:, 0:1, :]
        for i in range(1, N):
            bg = bg * q[:, i:i + 1, :]
        new_prob = jnp.clip(jnp.concatenate([bg, p], axis=1), 1e-7, 1.0 - 1e-7)
        r = new_prob / (1.0 - new_prob)                          # odds
        logits_ref[...] = jnp.log(r)
        # softmax(log r) == r / sum(r): no exp and no max-subtract pass needed.
        s = jnp.sum(r, axis=1, keepdims=True)
        mask_ref[...] = r * pl.reciprocal(s, approx=True)

    logits, pred_mask = pl.pallas_call(
        kernel,
        out_shape=(
            jax.ShapeDtypeStruct((B, N + 1, HWp), jnp.float32),
            jax.ShapeDtypeStruct((B, N + 1, HWp), jnp.float32),
        ),
        grid_spec=pltpu.PrefetchScalarGridSpec(
            num_scalar_prefetch=0,
            grid=(B, nt),
            in_specs=[
                pl.BlockSpec((1, N, 1), lambda b, t: (b, 0, 0)),      # valid_obj
                pl.BlockSpec((1, N, T), lambda b, t: (b, 0, t)),
            ],
            out_specs=[
                pl.BlockSpec((1, N + 1, T), lambda b, t: (b, 0, t)),
                pl.BlockSpec((1, N + 1, T), lambda b, t: (b, 0, t)),
            ],
        ),
        compiler_params=pltpu.CompilerParams(
            dimension_semantics=("parallel", "parallel"),
            vmem_limit_bytes=32 * 1024 * 1024,
        ),
    )(vo, dl)

    logits = logits[:, :, :HW].reshape(B, N + 1, H, W)
    pred_mask = pred_mask[:, :, :HW].reshape(B, N + 1, H, W)
    return logits, pred_mask


# ----------------------------------------------------------------------------
# Main
# ----------------------------------------------------------------------------
if __name__ == "__main__":
    key = jax.random.PRNGKey(0)
    k1, k2, k3, k4 = jax.random.split(key, 4)

    # Small, SWEM-consistent shapes
    B, C_FEAT, H16, W16 = 2, 16, 8, 8      # stride-16 feature map
    VALDIM = 8
    NOBJ = 3

    # --- key_comp conv ---
    s16 = jax.random.normal(k1, (B, C_FEAT, H16, W16), jnp.float32)
    w_comp = 0.1 * jax.random.normal(k2, (VALDIM, C_FEAT, 3, 3), jnp.float32)
    b_comp = 0.1 * jax.random.normal(k3, (VALDIM,), jnp.float32)

    qv16 = key_comp(s16, w_comp, b_comp)

    ref_conv = lax.conv_general_dilated(
        s16, w_comp, window_strides=(1, 1), padding="SAME",
        dimension_numbers=("NCHW", "OIHW", "NCHW"),
        precision=lax.Precision.HIGHEST,
    ) + b_comp[None, :, None, None]
    assert qv16.shape == (B, VALDIM, H16, W16)
    # bf16 MXU inputs with f32 accumulation -> loosened tolerance vs f32 reference
    assert bool(jnp.allclose(qv16, ref_conv, atol=5e-2, rtol=5e-2))

    # --- decode post-path (sigmoid + valid_obj + aggregate + softmax) ---
    dec_logits = jax.random.normal(k4, (B, NOBJ, H16, W16), jnp.float32)
    valid_obj = jnp.array([[1.0, 1.0, 1.0, 0.0],
                           [1.0, 1.0, 0.0, 1.0]], jnp.float32)  # (B, NOBJ+1)

    logits, pred_mask = decode_post(dec_logits, valid_obj)

    # pure-JAX reference of the same math
    preds_r = jax.nn.sigmoid(dec_logits) * valid_obj[:, 1:, None, None]
    bg_r = jnp.prod(1.0 - preds_r, axis=1, keepdims=True)
    np_r = jnp.clip(jnp.concatenate([bg_r, preds_r], axis=1), 1e-7, 1.0 - 1e-7)
    logits_r = jnp.log(np_r / (1.0 - np_r))
    mask_r = jax.nn.softmax(logits_r, axis=1)
    assert logits.shape == (B, NOBJ + 1, H16, W16)
    assert bool(jnp.allclose(logits, logits_r, atol=5e-3, rtol=5e-3))
    # approx reciprocal (EUP) in the softmax denominator -> ~2^-12 relative error budget
    assert bool(jnp.allclose(pred_mask, mask_r, atol=2e-3, rtol=2e-3))

    jax.block_until_ready((qv16, logits, pred_mask))
    print("KERNEL_OK")
</pallas_src>

<mosaic_0001>
module attributes {stable_mosaic.version = 11 : i64} {
  func.func @kernel(%arg0: i32, %arg1: i32, %arg2: memref<1x16x150xbf16, #tpu.memory_space<vmem>>, %arg3: memref<1x8x144xbf16, #tpu.memory_space<vmem>>, %arg4: memref<8x1xf32, #tpu.memory_space<vmem>>, %arg5: memref<1x8x128xf32, #tpu.memory_space<vmem>>, %arg6: memref<144x128xbf16, #tpu.memory_space<vmem>>, %arg7: memref<8x128xf32, #tpu.memory_space<vmem>>) attributes {dimension_semantics = [#tpu.dimension_semantics<parallel>, #tpu.dimension_semantics<arbitrary>], iteration_bounds = array<i64: 2, 1>, scalar_prefetch = 0 : i64, scratch_operands = 2 : i64, tpu.core_type = #tpu.core_type<tc>, window_params = [{transform_indices = @transform_0, window_bounds = array<i64: 1, 16, 150>}, {transform_indices = @transform_1, window_bounds = array<i64: 1, 8, 144>}, {pipeline_mode = #tpu.pipeline_mode<synchronous>, transform_indices = @transform_2, window_bounds = array<i64: 8, 1>}, {transform_indices = @transform_3, window_bounds = array<i64: 1, 8, 128>}]} {
    %c0_i32 = arith.constant 0 : i32
    %0 = arith.cmpi eq, %arg1, %c0_i32 : i32
    %1 = arith.extui %0 : i1 to i32
    %c0_i32_0 = arith.constant 0 : i32
    %2 = arith.cmpi ne, %1, %c0_i32_0 : i32
    scf.if %2 {
      %cst_40 = arith.constant 0.000000e+00 : f32
      %40 = vector.broadcast %cst_40 : f32 to vector<8x128xf32>
      %c0_41 = arith.constant 0 : index
      %c0_42 = arith.constant 0 : index
      %41 = vector.load %arg7[%c0_41, %c0_42] : memref<8x128xf32, #tpu.memory_space<vmem>>, vector<8x128xf32>
      tpu.vector_store %arg7[%c0_41, %c0_42], %40 {strides = array<i32>} : memref<8x128xf32, #tpu.memory_space<vmem>>, vector<8x128xf32>,
    } else {
    }
    %c0 = arith.constant 0 : index
    %c0_1 = arith.constant 0 : index
    %c0_2 = arith.constant 0 : index
    %3 = vector.load %arg2[%c0, %c0_1, %c0_2] : memref<1x16x150xbf16, #tpu.memory_space<vmem>>, vector<1x16x128xbf16>
    %4 = vector.shape_cast %3 : vector<1x16x128xbf16> to vector<16x128xbf16>
    %c0_3 = arith.constant 0 : index
    %c0_4 = arith.constant 0 : index
    %5 = vector.load %arg6[%c0_3, %c0_4] : memref<144x128xbf16, #tpu.memory_space<vmem>>, vector<16x128xbf16>
    tpu.vector_store %arg6[%c0_3, %c0_4], %4 {strides = array<i32>} : memref<144x128xbf16, #tpu.memory_space<vmem>>, vector<16x128xbf16>,
    %c0_5 = arith.constant 0 : index
    %c0_6 = arith.constant 0 : index
    %c1 = arith.constant 1 : index
    %6 = vector.load %arg2[%c0_5, %c0_6, %c1] : memref<1x16x150xbf16, #tpu.memory_space<vmem>>, vector<1x16x128xbf16>
    %7 = vector.shape_cast %6 : vector<1x16x128xbf16> to vector<16x128xbf16>
    %c16 = arith.constant 16 : index
    %c0_7 = arith.constant 0 : index
    %8 = vector.load %arg6[%c16, %c0_7] : memref<144x128xbf16, #tpu.memory_space<vmem>>, vector<16x128xbf16>
    tpu.vector_store %arg6[%c16, %c0_7], %7 {strides = array<i32>} : memref<144x128xbf16, #tpu.memory_space<vmem>>, vector<16x128xbf16>,
    %c0_8 = arith.constant 0 : index
    %c0_9 = arith.constant 0 : index
    %c2 = arith.constant 2 : index
    %9 = vector.load %arg2[%c0_8, %c0_9, %c2] : memref<1x16x150xbf16, #tpu.memory_space<vmem>>, vector<1x16x128xbf16>
    %10 = vector.shape_cast %9 : vector<1x16x128xbf16> to vector<16x128xbf16>
    %c32 = arith.constant 32 : index
    %c0_10 = arith.constant 0 : index
    %11 = vector.load %arg6[%c32, %c0_10] : memref<144x128xbf16, #tpu.memory_space<vmem>>, vector<16x128xbf16>
    tpu.vector_store %arg6[%c32, %c0_10], %10 {strides = array<i32>} : memref<144x128xbf16, #tpu.memory_space<vmem>>, vector<16x128xbf16>,
    %c0_11 = arith.constant 0 : index
    %c0_12 = arith.constant 0 : index
    %c10 = arith.constant 10 : index
    %12 = vector.load %arg2[%c0_11, %c0_12, %c10] : memref<1x16x150xbf16, #tpu.memory_space<vmem>>, vector<1x16x128xbf16>
    %13 = vector.shape_cast %12 : vector<1x16x128xbf16> to vector<16x128xbf16>
    %c48 = arith.constant 48 : index
    %c0_13 = arith.constant 0 : index
    %14 = vector.load %arg6[%c48, %c0_13] : memref<144x128xbf16, #tpu.memory_space<vmem>>, vector<16x128xbf16>
    tpu.vector_store %arg6[%c48, %c0_13], %13 {strides = array<i32>} : memref<144x128xbf16, #tpu.memory_space<vmem>>, vector<16x128xbf16>,
    %c0_14 = arith.constant 0 : index
    %c0_15 = arith.constant 0 : index
    %c11 = arith.constant 11 : index
    %15 = vector.load %arg2[%c0_14, %c0_15, %c11] : memref<1x16x150xbf16, #tpu.memory_space<vmem>>, vector<1x16x128xbf16>
    %16 = vector.shape_cast %15 : vector<1x16x128xbf16> to vector<16x128xbf16>
    %c64 = arith.constant 64 : index
    %c0_16 = arith.constant 0 : index
    %17 = vector.load %arg6[%c64, %c0_16] : memref<144x128xbf16, #tpu.memory_space<vmem>>, vector<16x128xbf16>
    tpu.vector_store %arg6[%c64, %c0_16], %16 {strides = array<i32>} : memref<144x128xbf16, #tpu.memory_space<vmem>>, vector<16x128xbf16>,
    %c0_17 = arith.constant 0 : index
    %c0_18 = arith.constant 0 : index
    %c12 = arith.constant 12 : index
    %18 = vector.load %arg2[%c0_17, %c0_18, %c12] : memref<1x16x150xbf16, #tpu.memory_space<vmem>>, vector<1x16x128xbf16>
    %19 = vector.shape_cast %18 : vector<1x16x128xbf16> to vector<16x128xbf16>
    %c80 = arith.constant 80 : index
    %c0_19 = arith.constant 0 : index
    %20 = vector.load %arg6[%c80, %c0_19] : memref<144x128xbf16, #tpu.memory_space<vmem>>, vector<16x128xbf16>
    tpu.vector_store %arg6[%c80, %c0_19], %19 {strides = array<i32>} : memref<144x128xbf16, #tpu.memory_space<vmem>>, vector<16x128xbf16>,
    %c0_20 = arith.constant 0 : index
    %c0_21 = arith.constant 0 : index
    %c20 = arith.constant 20 : index
    %21 = vector.load %arg2[%c0_20, %c0_21, %c20] : memref<1x16x150xbf16, #tpu.memory_space<vmem>>, vector<1x16x128xbf16>
    %22 = vector.shape_cast %21 : vector<1x16x128xbf16> to vector<16x128xbf16>
    %c96 = arith.constant 96 : index
    %c0_22 = arith.constant 0 : index
    %23 = vector.load %arg6[%c96, %c0_22] : memref<144x128xbf16, #tpu.memory_space<vmem>>, vector<16x128xbf16>
    tpu.vector_store %arg6[%c96, %c0_22], %22 {strides = array<i32>} : memref<144x128xbf16, #tpu.memory_space<vmem>>, vector<16x128xbf16>,
    %c0_23 = arith.constant 0 : index
    %c0_24 = arith.constant 0 : index
    %c21 = arith.constant 21 : index
    %24 = vector.load %arg2[%c0_23, %c0_24, %c21] : memref<1x16x150xbf16, #tpu.memory_space<vmem>>, vector<1x16x128xbf16>
    %25 = vector.shape_cast %24 : vector<1x16x128xbf16> to vector<16x128xbf16>
    %c112 = arith.constant 112 : index
    %c0_25 = arith.constant 0 : index
    %26 = vector.load %arg6[%c112, %c0_25] : memref<144x128xbf16, #tpu.memory_space<vmem>>, vector<16x128xbf16>
    tpu.vector_store %arg6[%c112, %c0_25], %25 {strides = array<i32>} : memref<144x128xbf16, #tpu.memory_space<vmem>>, vector<16x128xbf16>,
    %c0_26 = arith.constant 0 : index
    %c0_27 = arith.constant 0 : index
    %c22 = arith.constant 22 : index
    %27 = vector.load %arg2[%c0_26, %c0_27, %c22] : memref<1x16x150xbf16, #tpu.memory_space<vmem>>, vector<1x16x128xbf16>
    %28 = vector.shape_cast %27 : vector<1x16x128xbf16> to vector<16x128xbf16>
    %c128 = arith.constant 128 : index
    %c0_28 = arith.constant 0 : index
    %29 = vector.load %arg6[%c128, %c0_28] : memref<144x128xbf16, #tpu.memory_space<vmem>>, vector<16x128xbf16>
    tpu.vector_store %arg6[%c128, %c0_28], %28 {strides = array<i32>} : memref<144x128xbf16, #tpu.memory_space<vmem>>, vector<16x128xbf16>,
    %c0_29 = arith.constant 0 : index
    %c0_30 = arith.constant 0 : index
    %30 = vector.load %arg7[%c0_29, %c0_30] : memref<8x128xf32, #tpu.memory_space<vmem>>, vector<8x128xf32>
    %c0_31 = arith.constant 0 : index
    %c0_32 = arith.constant 0 : index
    %c0_33 = arith.constant 0 : index
    %31 = vector.load %arg3[%c0_31, %c0_32, %c0_33] : memref<1x8x144xbf16, #tpu.memory_space<vmem>>, vector<1x8x144xbf16>
    %32 = vector.shape_cast %31 : vector<1x8x144xbf16> to vector<8x144xbf16>
    %c0_34 = arith.constant 0 : index
    %c0_35 = arith.constant 0 : index
    %33 = vector.load %arg6[%c0_34, %c0_35] : memref<144x128xbf16, #tpu.memory_space<vmem>>, vector<144x128xbf16>
    %cst = arith.constant dense<0.000000e+00> : vector<8x128xf32>
    %34 = tpu.matmul %32, %33, %cst {dimension_numbers = #tpu.dot_dimension_numbers<[1], [0], [0], [1], [0, 0, 1, 1], [], []>} : vector<8x144xbf16>, vector<144x128xbf16>, vector<8x128xf32> -> vector<8x128xf32>
    %35 = arith.addf %30, %34 : vector<8x128xf32>
    %c0_36 = arith.constant 0 : index
    %c0_37 = arith.constant 0 : index
    %36 = vector.load %arg7[%c0_36, %c0_37] : memref<8x128xf32, #tpu.memory_space<vmem>>, vector<8x128xf32>
    tpu.vector_store %arg7[%c0_36, %c0_37], %35 {strides = array<i32>} : memref<8x128xf32, #tpu.memory_space<vmem>>, vector<8x128xf32>,
    %c0_i32_38 = arith.constant 0 : i32
    %37 = arith.cmpi eq, %arg1, %c0_i32_38 : i32
    %38 = arith.extui %37 : i1 to i32
    %c0_i32_39 = arith.constant 0 : i32
    %39 = arith.cmpi ne, %38, %c0_i32_39 : i32
    scf.if %39 {
      %c0_40 = arith.constant 0 : index
      %c0_41 = arith.constant 0 : index
      %40 = vector.load %arg7[%c0_40, %c0_41] : memref<8x128xf32, #tpu.memory_space<vmem>>, vector<8x128xf32>
      %c0_42 = arith.constant 0 : index
      %c0_43 = arith.constant 0 : index
      %41 = vector.load %arg4[%c0_42, %c0_43] : memref<8x1xf32, #tpu.memory_space<vmem>>, vector<8x1xf32>
      %42 = vector.broadcast %41 : vector<8x1xf32> to vector<8x128xf32>
      %43 = arith.addf %40, %42 : vector<8x128xf32>
      %c0_44 = arith.constant 0 : index
      %c0_45 = arith.constant 0 : index
      %c0_46 = arith.constant 0 : index
      %44 = vector.load %arg5[%c0_44, %c0_45, %c0_46] : memref<1x8x128xf32, #tpu.memory_space<vmem>>, vector<1x8x128xf32>
      %45 = vector.shape_cast %44 : vector<1x8x128xf32> to vector<8x128xf32>
      %46 = vector.shape_cast %43 : vector<8x128xf32> to vector<1x8x128xf32>
      tpu.vector_store %arg5[%c0_44, %c0_45, %c0_46], %46 {strides = array<i32>} : memref<1x8x128xf32, #tpu.memory_space<vmem>>, vector<1x8x128xf32>,
    } else {
    }
    return
  }
  func.func @transform_0(%arg0: i32, %arg1: i32) -> (i32, i32, i32) {
    %c0_i32 = arith.constant 0 : i32
    %c0_i32_0 = arith.constant 0 : i32
    return %arg0, %arg1, %c0_i32 : i32, i32, i32
  }
  func.func @transform_1(%arg0: i32, %arg1: i32) -> (i32, i32, i32) {
    %c0_i32 = arith.constant 0 : i32
    %c0_i32_0 = arith.constant 0 : i32
    %c0_i32_1 = arith.constant 0 : i32
    return %arg1, %c0_i32, %c0_i32_0 : i32, i32, i32
  }
  func.func @transform_2(%arg0: i32, %arg1: i32) -> (i32, i32) {
    %c0_i32 = arith.constant 0 : i32
    %c0_i32_0 = arith.constant 0 : i32
    %c0_i32_1 = arith.constant 0 : i32
    return %c0_i32, %c0_i32_0 : i32, i32
  }
  func.func @transform_3(%arg0: i32, %arg1: i32) -> (i32, i32, i32) {
    %c0_i32 = arith.constant 0 : i32
    %c0_i32_0 = arith.constant 0 : i32
    %c0_i32_1 = arith.constant 0 : i32
    return %arg0, %c0_i32, %c0_i32_0 : i32, i32, i32
  }
}

</mosaic_0001>

<llo_original>
// kernel: tpu_custom_call.1
$region0: #{tpu_custom_call.1}
  #allocation0 [shape = 'u32[]', space=smem, size = 0x4, offset = 0x4, fixed_abs, tag = 'smem constant byte address 0x4 - core index']
  #allocation1 [shape = 'u32[144,128]{1,0:T(1,128)}', space=vmem, size = 0x12000, scoped, tag = 'internal scratch']
  #allocation2 [shape = 'bf16[144,128]{1,0:T(8,128)(2,1)}', space=vmem, size = 0x9000, scoped, tag = 'scratch operand']
  #allocation3 [shape = 'f32[8,128]{1,0:T(8,128)}', space=vmem, size = 0x1000, scoped, tag = 'scratch operand']
  %s0 = inlined_call_operand.hbm [shape: bf16[2,16,150], index: 0, kind: input, shape index: {}]
  %s1 = inlined_call_operand.vmem [shape: bf16[1,8,144], index: 1, kind: input, shape index: {}]
  %s2 = inlined_call_operand.vmem [shape: f32[8,1], index: 2, kind: input, shape index: {}]
  %s3 = inlined_call_operand.hbm [shape: f32[2,8,128], index: 3, kind: output, shape index: {}]
  %s4 = sld [smem:[#allocation0]]
  $region57: #{tpu_custom_call.1} parent=0
    _
  %s6 = ssub.s32 1, %s4
  %s7 = scalar_select 0, %s6, %s4
  $region1: #{tpu_custom_call.1} parent=0
    #allocation4 [shape = 'u8[16384]{0}', space=vmem, size = 0x4000, scoped, tag = 'input window, operand 0']
    #allocation5 [shape = 's32[2]{0}', space=sflag, size = 0x8, scoped, tag = 'scoped memory for tpu_custom_call.1']
    #allocation6 [shape = 's32[2]{0}', space=sflag, size = 0x8, scoped, tag = 'scoped memory for tpu_custom_call.1']
    #allocation7 [shape = 'u8[8192]{0}', space=vmem, size = 0x2000, scoped, tag = 'output window, operand 0']
    %8 = vsyncpa [#allocation5], 0
    %s9 = scalar_lea.sflag [#allocation5], 1
    %10 = vsyncpa %s9, 0
    %11 = vsyncpa [#allocation6], 0
    %s12 = scalar_lea.sflag [#allocation6], 1
    %13 = vsyncpa %s12, 0
    loop: start=0, step=1, limit=4
    $region2: #{tpu_custom_call.1} parent=1 // loop_pre_header
      _
    $region3: #{tpu_custom_call.1} parent=1 // loop_header
      %s15 = sphi 0, %s19
      %p16 = scmp.ge.s32.totalorder %s15, 4
      %s22 = sphi 0, %s34
      %s23 = sphi 0, %s30
      %s24 = sphi 0, %s22
      %s25 = sphi 0, %s23
      %s26 = sphi 0, %s24
      %s27 = sphi 0, %s25
      %s39 = sphi 0, %s41
      %s42 = sphi 0, %s39
      %s43 = sphi 0, %s42
      %s59 = sphi 0, %s43
      %s65 = sphi 0, %s67
      %s68 = sphi 0, %s65
      %s69 = sphi 0, %s68
      %s85 = sphi 0, %s69
      %s89 = sphi 0, %s89
      %s91 = sphi 0, %s89
      %s92 = sphi 0, %s91
      %s106 = sphi 0, %s92
      %s112 = sphi 0, %s114
      %s115 = sphi 0, %s112
      %s116 = sphi 0, %s115
      %s132 = sphi 0, %s116
    $region4: #{tpu_custom_call.1} parent=1 // loop_header_branch
      %18 = sbr.rel (%p16) target = $region8
    $region5: #{tpu_custom_call.1} parent=1 // loop_body
      %s20 = ssub.s32 %s15, 1
      %s21 = ssub.s32 %s15, 2
      %s28 = sadd.s32 1, %s23
      %p29 = scmp.ge.s32.totalorder %s28, 1
      %s30 = scalar_select %p29, 0, %s28
      %s31 = sadd.s32 1, %s22
      %s32 = scalar_select %p29, %s31, %s22
      %p33 = scmp.ge.s32.totalorder %s32, 2
      %s34 = scalar_select %p33, 0, %s32
      %s35 = ssub.s32 %s22, %s34
      %s36 = ssub.s32 %s23, %s30
      %s37 = sor.u32 %s35, %s36
      %p38 = scmp.eq.s32.totalorder %s37, 0
      %s40 = sadd.s32 %s39, 1
      %s41 = scalar_select %p38, %s39, %s40
      %p44 = pneg %p38
      %p45 = scmp.eq.s32.totalorder %s15, 1
      %p46 = por %p44, %p45
      %p47 = scmp.ne.s32.totalorder %s39, %s42
      %p48 = scmp.eq.s32.totalorder %s15, 0
      %p49 = por %p47, %p48
      %p50 = scmp.ne.s32.totalorder %s39, %s42
      %p51 = scmp.eq.s32.totalorder %s20, 1
      %p52 = por %p50, %p51
      %p53 = scmp.ne.s32.totalorder %s42, %s43
      %p54 = scmp.eq.s32.totalorder %s20, 0
      %p55 = por %p53, %p54
      %p56 = scmp.ne.s32.totalorder %s42, %s43
      %p57 = scmp.eq.s32.totalorder %s21, 1
      %p58 = por %p56, %p57
      %p60 = scmp.ne.s32.totalorder %s43, %s59
      %p61 = scmp.eq.s32.totalorder %s21, 0
      %p62 = por %p60, %p61
      %s63 = ssub.s32 %s23, %s30
      %p64 = scmp.eq.s32.totalorder %s63, 0
      %s66 = sadd.s32 %s65, 1
      %s67 = scalar_select %p64, %s65, %s66
      %p70 = pneg %p64
      %p71 = scmp.eq.s32.totalorder %s15, 1
      %p72 = por %p70, %p71
      %p73 = scmp.ne.s32.totalorder %s65, %s68
      %p74 = scmp.eq.s32.totalorder %s15, 0
      %p75 = por %p73, %p74
      %p76 = scmp.ne.s32.totalorder %s65, %s68
      %p77 = scmp.eq.s32.totalorder %s20, 1
      %p78 = por %p76, %p77
      %p79 = scmp.ne.s32.totalorder %s68, %s69
      %p80 = scmp.eq.s32.totalorder %s20, 0
      %p81 = por %p79, %p80
      %p82 = scmp.ne.s32.totalorder %s68, %s69
      %p83 = scmp.eq.s32.totalorder %s21, 1
      %p84 = por %p82, %p83
      %p86 = scmp.ne.s32.totalorder %s69, %s85
      %p87 = scmp.eq.s32.totalorder %s21, 0
      %p88 = por %p86, %p87
      %s90 = sadd.s32 %s89, 1
      %p93 = scmp.eq.s32.totalorder %s15, 1
      %p94 = scmp.ne.s32.totalorder %s89, %s91
      %p95 = scmp.eq.s32.totalorder %s15, 0
      %p96 = por %p94, %p95
      %p97 = scmp.ne.s32.totalorder %s89, %s91
      %p98 = scmp.eq.s32.totalorder %s20, 1
      %p99 = por %p97, %p98
      %p100 = scmp.ne.s32.totalorder %s91, %s92
      %p101 = scmp.eq.s32.totalorder %s20, 0
      %p102 = por %p100, %p101
      %p103 = scmp.ne.s32.totalorder %s91, %s92
      %p104 = scmp.eq.s32.totalorder %s21, 1
      %p105 = por %p103, %p104
      %p107 = scmp.ne.s32.totalorder %s92, %s106
      %p108 = scmp.eq.s32.totalorder %s21, 0
      %p109 = por %p107, %p108
      %s110 = ssub.s32 %s22, %s34
      %p111 = scmp.eq.s32.totalorder %s110, 0
      %s113 = sadd.s32 %s112, 1
      %s114 = scalar_select %p111, %s112, %s113
      %p117 = pneg %p111
      %p118 = scmp.eq.s32.totalorder %s15, 1
      %p119 = por %p117, %p118
      %p120 = scmp.ne.s32.totalorder %s112, %s115
      %p121 = scmp.eq.s32.totalorder %s15, 0
      %p122 = por %p120, %p121
      %p123 = scmp.ne.s32.totalorder %s112, %s115
      %p124 = scmp.eq.s32.totalorder %s20, 1
      %p125 = por %p123, %p124
      %p126 = scmp.ne.s32.totalorder %s115, %s116
      %p127 = scmp.eq.s32.totalorder %s20, 0
      %p128 = por %p126, %p127
      %p129 = scmp.ne.s32.totalorder %s115, %s116
      %p130 = scmp.eq.s32.totalorder %s21, 1
      %p131 = por %p129, %p130
      %p133 = scmp.ne.s32.totalorder %s116, %s132
      %p134 = scmp.eq.s32.totalorder %s21, 0
      %p135 = por %p133, %p134
      %p136 = scmp.le.s32.totalorder 1, %s15
      %p137 = scmp.lt.s32.totalorder %s15, 3
      %p138 = pnand %p136, %p137
      %p139 = pneg %p138
      // Predicated region
      $region9: #{tpu_custom_call.1} parent=5 // pred_check
        _
      $region10: #{tpu_custom_call.1} parent=5 // pred_check_branch
        %141 = sbr.rel (%p138) target = $region12
      $region11: #{tpu_custom_call.1} parent=5 // pred_region
        %s142 = ssub.s32 %s15, 1
        // Predicated region
        $region13: #{tpu_custom_call.1} parent=11 // pred_check
          %p143 = pneg %p81
        $region14: #{tpu_custom_call.1} parent=11 // pred_check_branch
          %145 = sbr.rel (%p143) target = $region16
        $region15: #{tpu_custom_call.1} parent=11 // pred_region
          %p146 = scmp.lt.s32.totalorder %s25, 0
          %s147 = scalar_select %p146, %s25, 0
          %s148 = smul.addr %s147, 2
          %s149 = smul.addr %s148, 4
          %s150 = scalar_lea.vmem %s1, %s149
        $region16: #{tpu_custom_call.1} parent=11 // pred_fallthru
          _
        // Predicated region
        $region17: #{tpu_custom_call.1} parent=11 // pred_check
          %p151 = pneg %p102
        $region18: #{tpu_custom_call.1} parent=11 // pred_check_branch
          %153 = sbr.rel (%p151) target = $region20
        $region19: #{tpu_custom_call.1} parent=11 // pred_region
          _
        $region20: #{tpu_custom_call.1} parent=11 // pred_fallthru
          _
      $region12: #{tpu_custom_call.1} parent=5 // pred_fallthru
        _
      %p154 = scmp.lt.s32.totalorder %s15, 2
      // Predicated region
      $region21: #{tpu_custom_call.1} parent=5 // pred_check
        %p155 = pneg %p154
      $region22: #{tpu_custom_call.1} parent=5 // pred_check_branch
        %157 = sbr.rel (%p155) target = $region24
      $region23: #{tpu_custom_call.1} parent=5 // pred_region
        // Predicated region
        $region25: #{tpu_custom_call.1} parent=23 // pred_check
          %p158 = pneg %p49
        $region26: #{tpu_custom_call.1} parent=23 // pred_check_branch
          %160 = sbr.rel (%p158) target = $region28
        $region27: #{tpu_custom_call.1} parent=23 // pred_region
          %s161 = sand.u32 %s39, 1
          %s162 = scalar_lea.sflag [#allocation5], %s161
          %s163 = sand.u32 %s39, 1
          %s164 = smul.addr %s163, 16
          %s165 = scalar_lea.vmem [#allocation4], %s164
          %s166 = smul.u32 2, %s23
          %s168 = ssub.s32 256, 256
          %169 = vsyncadd %s162, %s168
          %s170 = smul.addr %s166, 2
          %s171 = smul.addr %s22, 4
          %s172 = sadd.s32 %s170, %s171
          %s173 = smul.addr %s172, 64
          %s174 = scalar_lea.hbm %s0, %s173
          %s175 = sshll.u32 %s165, 4
          %s176 = int_to_ptr.vmem [resolvable:$true] %s175
          %181 = dma.hbm_to_vmem [thread:$0]  %s174, 256, %s176, %s162, 128, 128, 8
        $region28: #{tpu_custom_call.1} parent=23 // pred_fallthru
          _
      $region24: #{tpu_custom_call.1} parent=5 // pred_fallthru
        _
      %p182 = scmp.le.s32.totalorder 1, %s15
      %p183 = scmp.lt.s32.totalorder %s15, 3
      %p184 = pnand %p182, %p183
      %p185 = pneg %p184
      // Predicated region
      $region29: #{tpu_custom_call.1} parent=5 // pred_check
        _
      $region30: #{tpu_custom_call.1} parent=5 // pred_check_branch
        %187 = sbr.rel (%p184) target = $region32
      $region31: #{tpu_custom_call.1} parent=5 // pred_region
        %s188 = ssub.s32 %s15, 1
        %s189 = sand.u32 %s42, 1
        %s190 = scalar_lea.sflag [#allocation5], %s189
        %s191 = sand.u32 %s42, 1
        %s192 = smul.addr %s191, 16
        %s193 = scalar_lea.vmem [#allocation4], %s192
        // Predicated region
        $region33: #{tpu_custom_call.1} parent=31 // pred_check
          %p194 = pneg %p55
        $region34: #{tpu_custom_call.1} parent=31 // pred_check_branch
          %196 = sbr.rel (%p194) target = $region36
        $region35: #{tpu_custom_call.1} parent=31 // pred_region
          %197 = dma.done %s190, 256
        $region36: #{tpu_custom_call.1} parent=31 // pred_fallthru
          _
        %s198 = sand.u32 %s42, 1
        %s199 = scalar_lea.sflag [#allocation5], %s198
        %s200 = sand.u32 %s42, 1
        %s201 = smul.addr %s200, 16
        %s202 = scalar_lea.vmem [#allocation4], %s201
        %p203 = pneg %p55
        %p204 = pneg %p52
        %p205 = scmp.lt.s32.totalorder %s25, 0
        %s206 = scalar_select %p205, %s25, 0
        %s207 = smul.addr %s206, 2
        %s208 = smul.addr %s207, 4
        %s209 = scalar_lea.vmem %s1, %s208
        %p210 = pneg %p81
        %p211 = pneg %p78
        %p212 = pneg %p102
        %p213 = pneg %p99
        %p214 = pneg %p128
        %p215 = pneg %p125
        %s216 = sand.u32 %s115, 1
        %s217 = scalar_lea.sflag [#allocation6], %s216
        %s218 = sand.u32 %s115, 1
        %s219 = smul.addr %s218, 8
        %s220 = scalar_lea.vmem [#allocation7], %s219
        %s221 = smul.u32 2, %s25
        %p222 = scmp.lt.s32.totalorder %s25, 0
        %s223 = scalar_select %p222, %s25, 0
        %s224 = smul.addr %s223, 2
        %s225 = smul.addr %s224, 4
        %s226 = scalar_lea.vmem %s1, %s225
        %p228 = scmp.eq.s32.totalorder %s25, 0
        // Predicated region
        $region37: #{tpu_custom_call.1} parent=31 // pred_check
          %p229 = pneg %p228
        $region38: #{tpu_custom_call.1} parent=31 // pred_check_branch
          %231 = sbr.rel (%p229) target = $region40
        $region39: #{tpu_custom_call.1} parent=31 // pred_region
          %232 = vst [vmem:[#allocation3] sm:$0xff] 0.0
        $region40: #{tpu_custom_call.1} parent=31 // pred_fallthru
          _
        %v233 = vld [vmem:[%s193] sm:$0xf]
        %v234 = vld [vmem:[%s193 + $0x8] sm:$0xf]
        %235 = vst [vmem:[#allocation2] sm:$0xf] %v233
        %236 = vst [vmem:[#allocation2 + $0x4] sm:$0xf] %v234
        %v237 = vld [vmem:[%s193] sm:$0xff]
        %v238 = vld [vmem:[%s193 + $0x8] sm:$0xff]
        %241 = vrot.lane.b32.xlu0 %v237, 127
        %v242 = vpop.permute.xlu0 %241
        %243 = vrot.lane.b32.xlu0 %v238, 127
        %v244 = vpop.permute.xlu0 %243
        %v245 = vrot.slane %v242, 4
        %v246 = vrot.slane %v244, 4
        %vm247 = vcmask 1039360
        %v248 = vsel %vm247, %v242, %v245
        %v249 = vsel %vm247, %v244, %v246
        %252 = vst [vmem:[#allocation2 + $0x8] sm:$0xf] %v248
        %253 = vst [vmem:[#allocation2 + $0xc] sm:$0xf] %v249
        %v254 = vld [vmem:[%s193] sm:$0xff]
        %v255 = vld [vmem:[%s193 + $0x8] sm:$0xff]
        %258 = vrot.lane.b32.xlu0 %v254, 126
        %v259 = vpop.permute.xlu0 %258
        %260 = vrot.lane.b32.xlu0 %v255, 126
        %v261 = vpop.permute.xlu0 %260
        %v262 = vrot.slane %v259, 4
        %v263 = vrot.slane %v261, 4
        %vm264 = vcmask 1031168
        %v265 = vsel %vm264, %v259, %v262
        %v266 = vsel %vm264, %v261, %v263
        %269 = vst [vmem:[#allocation2 + $0x10] sm:$0xf] %v265
        %270 = vst [vmem:[#allocation2 + $0x14] sm:$0xf] %v266
        %v271 = vld [vmem:[%s193] sm:$0xff]
        %v272 = vld [vmem:[%s193 + $0x8] sm:$0xff]
        %275 = vrot.lane.b32.xlu0 %v271, 118
        %v276 = vpop.permute.xlu0 %275
        %277 = vrot.lane.b32.xlu0 %v272, 118
        %v278 = vpop.permute.xlu0 %277
        %v279 = vrot.slane %v276, 4
        %v280 = vrot.slane %v278, 4
        %vm281 = vcmask 965632
        %v282 = vsel %vm281, %v276, %v279
        %v283 = vsel %vm281, %v278, %v280
        %286 = vst [vmem:[#allocation2 + $0x18] sm:$0xf] %v282
        %287 = vst [vmem:[#allocation2 + $0x1c] sm:$0xf] %v283
        %v288 = vld [vmem:[%s193] sm:$0xff]
        %v289 = vld [vmem:[%s193 + $0x8] sm:$0xff]
        %292 = vrot.lane.b32.xlu0 %v288, 117
        %v293 = vpop.permute.xlu0 %292
        %294 = vrot.lane.b32.xlu0 %v289, 117
        %v295 = vpop.permute.xlu0 %294
        %v296 = vrot.slane %v293, 4
        %v297 = vrot.slane %v295, 4
        %vm298 = vcmask 957440
        %v299 = vsel %vm298, %v293, %v296
        %v300 = vsel %vm298, %v295, %v297
        %303 = vst [vmem:[#allocation2 + $0x20] sm:$0xf] %v299
        %304 = vst [vmem:[#allocation2 + $0x24] sm:$0xf] %v300
        %v305 = vld [vmem:[%s193] sm:$0xff]
        %v306 = vld [vmem:[%s193 + $0x8] sm:$0xff]
        %309 = vrot.lane.b32.xlu0 %v305, 116
        %v310 = vpop.permute.xlu0 %309
        %311 = vrot.lane.b32.xlu0 %v306, 116
        %v312 = vpop.permute.xlu0 %311
        %v313 = vrot.slane %v310, 4
        %v314 = vrot.slane %v312, 4
        %vm315 = vcmask 949248
        %v316 = vsel %vm315, %v310, %v313
        %v317 = vsel %vm315, %v312, %v314
        %320 = vst [vmem:[#allocation2 + $0x28] sm:$0xf] %v316
        %321 = vst [vmem:[#allocation2 + $0x2c] sm:$0xf] %v317
        %v322 = vld [vmem:[%s193] sm:$0xff]
        %v323 = vld [vmem:[%s193 + $0x8] sm:$0xff]
        %326 = vrot.lane.b32.xlu0 %v322, 108
        %v327 = vpop.permute.xlu0 %326
        %328 = vrot.lane.b32.xlu0 %v323, 108
        %v329 = vpop.permute.xlu0 %328
        %v330 = vrot.slane %v327, 4
        %v331 = vrot.slane %v329, 4
        %vm332 = vcmask 883712
        %v333 = vsel %vm332, %v327, %v330
        %v334 = vsel %vm332, %v329, %v331
        %337 = vst [vmem:[#allocation2 + $0x30] sm:$0xf] %v333
        %338 = vst [vmem:[#allocation2 + $0x34] sm:$0xf] %v334
        %v339 = vld [vmem:[%s193] sm:$0xff]
        %v340 = vld [vmem:[%s193 + $0x8] sm:$0xff]
        %343 = vrot.lane.b32.xlu0 %v339, 107
        %v344 = vpop.permute.xlu0 %343
        %345 = vrot.lane.b32.xlu0 %v340, 107
        %v346 = vpop.permute.xlu0 %345
        %v347 = vrot.slane %v344, 4
        %v348 = vrot.slane %v346, 4
        %vm349 = vcmask 875520
        %v350 = vsel %vm349, %v344, %v347
        %v351 = vsel %vm349, %v346, %v348
        %354 = vst [vmem:[#allocation2 + $0x38] sm:$0xf] %v350
        %355 = vst [vmem:[#allocation2 + $0x3c] sm:$0xf] %v351
        %v356 = vld [vmem:[%s193] sm:$0xff]
        %v357 = vld [vmem:[%s193 + $0x8] sm:$0xff]
        %360 = vrot.lane.b32.xlu0 %v356, 106
        %v361 = vpop.permute.xlu0 %360
        %362 = vrot.lane.b32.xlu0 %v357, 106
        %v363 = vpop.permute.xlu0 %362
        %v364 = vrot.slane %v361, 4
        %v365 = vrot.slane %v363, 4
        %vm366 = vcmask 867328
        %v367 = vsel %vm366, %v361, %v364
        %v368 = vsel %vm366, %v363, %v365
        %371 = vst [vmem:[#allocation2 + $0x40] sm:$0xf] %v367
        %372 = vst [vmem:[#allocation2 + $0x44] sm:$0xf] %v368
        %v373 = vld [vmem:[#allocation3] sm:$0xff]
        %v374 = vld [vmem:[%s226] sm:$0xff]
        %v375 = vld [vmem:[#allocation2] sm:$0xf]
        %v376 = vld [vmem:[#allocation2 + $0x4] sm:$0xf]
        %v377 = vld [vmem:[#allocation2 + $0x8] sm:$0xf]
        %v378 = vld [vmem:[#allocation2 + $0xc] sm:$0xf]
        %v379 = vld [vmem:[#allocation2 + $0x10] sm:$0xf]
        %v380 = vld [vmem:[#allocation2 + $0x14] sm:$0xf]
        %v381 = vld [vmem:[#allocation2 + $0x18] sm:$0xf]
        %v382 = vld [vmem:[#allocation2 + $0x1c] sm:$0xf]
        %v383 = vld [vmem:[#allocation2 + $0x20] sm:$0xf]
        %v384 = vld [vmem:[#allocation2 + $0x24] sm:$0xf]
        %v385 = vld [vmem:[#allocation2 + $0x28] sm:$0xf]
        %v386 = vld [vmem:[#allocation2 + $0x2c] sm:$0xf]
        %v387 = vld [vmem:[#allocation2 + $0x30] sm:$0xf]
        %v388 = vld [vmem:[#allocation2 + $0x34] sm:$0xf]
        %v389 = vld [vmem:[#allocation2 + $0x38] sm:$0xf]
        %v390 = vld [vmem:[#allocation2 + $0x3c] sm:$0xf]
        %v391 = vld [vmem:[#allocation2 + $0x40] sm:$0xf]
        %v392 = vld [vmem:[#allocation2 + $0x44] sm:$0xf]
        %v394 = vunpack.c.l.b16 %v374
        %v395 = vunpack.c.h.b16 %v374
        %v396 = vpack.c.b16 %v394, %v394
        %v397 = vpack.c.b16 %v395, %v395
        %v417 = vunpack.c.l.b16 %v375
        %v418 = vunpack.c.l.b16 %v376
        %v419 = vunpack.c.l.b16 %v377
        %v420 = vunpack.c.l.b16 %v378
        %v421 = vunpack.c.l.b16 %v379
        %v422 = vunpack.c.l.b16 %v380
        %v423 = vunpack.c.l.b16 %v381
        %v424 = vunpack.c.l.b16 %v382
        %v425 = vunpack.c.l.b16 %v383
        %v426 = vunpack.c.l.b16 %v384
        %v427 = vunpack.c.l.b16 %v385
        %v428 = vunpack.c.l.b16 %v386
        %v429 = vunpack.c.l.b16 %v387
        %v430 = vunpack.c.l.b16 %v388
        %v431 = vunpack.c.l.b16 %v389
        %v432 = vunpack.c.l.b16 %v390
        %v433 = vunpack.c.l.b16 %v391
        %v434 = vunpack.c.l.b16 %v392
        %v435 = vpack.c.b16 %v418, %v417
        %v436 = vpack.c.b16 %v420, %v419
        %v437 = vpack.c.b16 %v422, %v421
        %v438 = vpack.c.b16 %v424, %v423
        %v439 = vpack.c.b16 %v426, %v425
        %v440 = vpack.c.b16 %v428, %v427
        %v441 = vpack.c.b16 %v430, %v429
        %v442 = vpack.c.b16 %v432, %v431
        %v443 = vpack.c.b16 %v434, %v433
        %vm453 = vcmask 130048
        %v455 = vsel %vm453, %v397, 0
        %457 = vmatprep.subr.bf16.mxu0 0
        %458 = vmatpush1.bf16.msra.mxu0 %v442
        %459 = vmatprep.subr.bf16.mxu0 0
        %460 = vmatpush1.bf16.msra.mxu0 %v441
        %461 = vmatprep.subr.bf16.mxu0 0
        %462 = vmatpush1.bf16.msra.mxu0 %v440
        %463 = vmatprep.subr.bf16.mxu0 0
        %464 = vmatpush1.bf16.msra.mxu0 %v439
        %465 = vmatprep.subr.bf16.mxu0 0
        %466 = vmatpush1.bf16.msra.mxu0 %v438
        %467 = vmatprep.subr.bf16.mxu0 0
        %468 = vmatpush1.bf16.msra.mxu0 %v437
        %469 = vmatprep.subr.bf16.mxu0 0
        %470 = vmatpush1.bf16.msra.mxu0 %v436
        %471 = vmatprep.subr.bf16.mxu0 0
        %472 = vmatpush1.bf16.msra.mxu0 %v435
        %473 = vmatprep.subr.bf16.mxu0 0
        %474 = vmatpush2.bf16.msra.mxu0 0
        %475 = vmatprep.subr.bf16.mxu0 0
        %476 = vmatpush2.bf16.msra.mxu0 0
        %477 = vmatprep.subr.bf16.mxu0 0
        %478 = vmatpush2.bf16.msra.mxu0 0
        %479 = vmatprep.subr.bf16.mxu0 0
        %480 = vmatpush2.bf16.msra.mxu0 0
        %481 = vmatprep.subr.bf16.mxu0 0
        %482 = vmatpush2.bf16.msra.mxu0 0
        %483 = vmatprep.subr.bf16.mxu0 0
        %484 = vmatpush2.bf16.msra.mxu0 0
        %485 = vmatprep.subr.bf16.mxu0 0
        %486 = vmatpush2.bf16.msra.mxu0 0
        %487 = vmatprep.subr.bf16.mxu0 0
        %488 = vmatpush2.bf16.msra.mxu0 %v443
        %489 = vmatprep.mubr.bf16.mxu0 %v455
        %490 = vmatmul.mubr.bf16.gmra.mxu0 %v396
        %v491 = vpop.f32.mrf.mxu0
        %v492 = vadd.f32 0.0, %v491
        %v493 = vpop.f32.mrf.mxu0
        %v494 = vpop.f32.mrf.mxu0
        %v495 = vpop.f32.mrf.mxu0
        %496 = vdwg.mxu0
        %v497 = vadd.f32 %v373, %v492
        %498 = vst [vmem:[#allocation3] sm:$0xff] %v497
        // Predicated region
        $region41: #{tpu_custom_call.1} parent=31 // pred_check
          %p499 = pneg %p228
        $region42: #{tpu_custom_call.1} parent=31 // pred_check_branch
          %501 = sbr.rel (%p499) target = $region44
        $region43: #{tpu_custom_call.1} parent=31 // pred_region
          %v502 = vld [vmem:[#allocation3] sm:$0xff]
          %v503 = vld [vmem:[%s2] sm:$0xff]
          %505 = vset.pattern.permute.xlu0 0
          %506 = vperm.xlu0 %505, %v503
          %v507 = vpop.permute.xlu0 %506
          %v509 = vadd.f32 %v502, %v507
          %510 = vst [vmem:[%s220] sm:$0xff] %v509
        $region44: #{tpu_custom_call.1} parent=31 // pred_fallthru
          _
        %s511 = sand.u32 %s115, 1
        %s512 = scalar_lea.sflag [#allocation6], %s511
        %s513 = sand.u32 %s115, 1
        %s514 = smul.addr %s513, 8
        %s515 = scalar_lea.vmem [#allocation7], %s514
        // Predicated region
        $region45: #{tpu_custom_call.1} parent=31 // pred_check
          %p516 = pneg %p125
        $region46: #{tpu_custom_call.1} parent=31 // pred_check_branch
          %518 = sbr.rel (%p516) target = $region48
        $region47: #{tpu_custom_call.1} parent=31 // pred_region
          %s520 = ssub.s32 128, 128
          %521 = vsyncadd %s512, %s520
          %s522 = smul.addr %s24, 128
          %s523 = scalar_lea.hbm %s3, %s522
          %s525 = sshll.u32 %s515, 4
          %s526 = int_to_ptr.vmem [resolvable:$true] %s525
          %528 = dma.vmem_to_hbm [thread:$0]  %s526, 128, %s523, %s512
        $region48: #{tpu_custom_call.1} parent=31 // pred_fallthru
          _
      $region32: #{tpu_custom_call.1} parent=5 // pred_fallthru
        _
      %p529 = scmp.le.s32.totalorder 2, %s15
      // Predicated region
      $region49: #{tpu_custom_call.1} parent=5 // pred_check
        %p530 = pneg %p529
      $region50: #{tpu_custom_call.1} parent=5 // pred_check_branch
        %532 = sbr.rel (%p530) target = $region52
      $region51: #{tpu_custom_call.1} parent=5 // pred_region
        %s533 = ssub.s32 %s15, 2
        // Predicated region
        $region53: #{tpu_custom_call.1} parent=51 // pred_check
          %p534 = pneg %p131
        $region54: #{tpu_custom_call.1} parent=51 // pred_check_branch
          %536 = sbr.rel (%p534) target = $region56
        $region55: #{tpu_custom_call.1} parent=51 // pred_region
          %s537 = sand.u32 %s116, 1
          %s538 = scalar_lea.sflag [#allocation6], %s537
          %s539 = sand.u32 %s116, 1
          %s540 = smul.addr %s539, 8
          %s541 = scalar_lea.vmem [#allocation7], %s540
          %542 = dma.done %s538, 128
        $region56: #{tpu_custom_call.1} parent=51 // pred_fallthru
          _
      $region52: #{tpu_custom_call.1} parent=5 // pred_fallthru
        _
    $region6: #{tpu_custom_call.1} parent=1 // loop_footer
      %s19 = sadd.s32 1, %s15
    $region7: #{tpu_custom_call.1} parent=1 // loop_footer_branch
      %14 = sbr.rel target = $region3
    $region8: #{tpu_custom_call.1} parent=1 // loop_exit
      _
    %543 = vsyncpa [#allocation5], 1
    %s544 = scalar_lea.sflag [#allocation5], 1
    %545 = vsyncpa %s544, 1
    %546 = vsyncpa [#allocation6], 1
    %s547 = scalar_lea.sflag [#allocation6], 1
    %548 = vsyncpa %s547, 1

</llo_original>
